<compile_context>
chip_gen: v5e
topology: v5e:2x2
jax: 0.10.0
libtpu: 0.0.40
codegen_flags: <defaults>
</compile_context>

<pallas_src>
import jax
import jax.numpy as jnp
from jax import lax
from jax.experimental import pallas as pl
from jax.experimental.pallas import tpu as pltpu


def _round_up(x, m):
    return ((x + m - 1) // m) * m


def _fit_tile(dim, tile_max, align):
    """Largest aligned tile <= tile_max that splits `dim` into nearly equal chunks
    (keeps edge padding under one alignment block instead of a near-full tile)."""
    tile_max = max(align, (tile_max // align) * align)
    n_chunks = pl.cdiv(dim, tile_max)
    return min(_round_up(pl.cdiv(dim, n_chunks), align), tile_max)


def _make_linear_kernel(K, tk):
    """One (tm, tn) output tile; grid axis 2 is the K reduction."""
    k_tail = K % tk  # nonzero => last K tile is partial and must be masked

    def kernel(x_ref, w_ref, b_ref, o_ref, acc_ref):
        k = pl.program_id(2)

        x = x_ref[...]
        if k_tail:
            # x is NOT padded along K in HBM; zero the out-of-range lanes of the
            # (partial) last K tile so garbage never enters the reduction.
            lane = lax.broadcasted_iota(jnp.int32, x.shape, 1)
            x = jnp.where(k * tk + lane < K, x, jnp.zeros_like(x))

        # MXU-native: contraction dim is the lane dim of x and sublane dim of w.
        prod = jnp.dot(x, w_ref[...], preferred_element_type=jnp.float32)

        @pl.when(k == 0)
        def _():
            acc_ref[...] = prod          # write first partial product directly

        @pl.when(k > 0)
        def _():
            acc_ref[...] += prod

        @pl.when(k == pl.num_programs(2) - 1)
        def _():
            # Bias added exactly once at finalize; (1, tn) broadcasts over (tm, tn).
            o_ref[...] = (acc_ref[...] + b_ref[...]).astype(o_ref.dtype)

    return kernel


def prepare_linear_params(weight, bias, *, tn_max=512, tk_max=512):
    """One-time init-side prep (hoisted out of the per-call hot path):
    transpose the nn.Linear weight to MXU-native (K, N) and zero-pad W/bias to
    tile multiples so the kernel never sees garbage along K and the wrapper never
    pads per call."""
    N, K = weight.shape
    tn = _fit_tile(N, tn_max, 128)
    tk = _fit_tile(K, tk_max, 128)
    Kp, Np = _round_up(K, tk), _round_up(N, tn)
    w_t = jnp.pad(weight.T, ((0, Kp - K), (0, Np - N)))      # (Kp, Np), zeros in K tail
    b_p = jnp.pad(bias.reshape(1, -1), ((0, 0), (0, Np - N)))  # (1, Np)
    return w_t, b_p, (N, K, tn, tk)


def linear_pallas(x, w_t, b_p, meta, *, tm_max=512):
    """y = x @ weight.T + bias (torch.nn.Linear semantics).

    x:    (..., K) float32
    w_t:  (Kp, Np) pre-transposed, pre-padded weight from prepare_linear_params
    b_p:  (1, Np)  pre-padded bias
    """
    N, K, tn, tk = meta
    lead = x.shape[:-1]
    x2d = x.reshape(-1, K)
    M = x2d.shape[0]
    tm = _fit_tile(M, tm_max, 8)

    # NOTE(v7x): for skinny-M (decode) shapes, halving tn_max at init keeps the
    # M*N tile grid >= 2 so both TensorCores get work under "parallel" semantics.
    grid = (pl.cdiv(M, tm), pl.cdiv(N, tn), pl.cdiv(K, tk))

    itemsize = jnp.dtype(x.dtype).itemsize
    cost = pl.CostEstimate(
        flops=2 * M * N * K,
        transcendentals=0,
        bytes_accessed=itemsize * (M * K + K * N + M * N),
    )

    y2d = pl.pallas_call(
        _make_linear_kernel(K, tk),
        out_shape=jax.ShapeDtypeStruct((M, N), x.dtype),
        grid_spec=pltpu.PrefetchScalarGridSpec(
            num_scalar_prefetch=0,
            grid=grid,
            in_specs=[
                pl.BlockSpec((tm, tk), lambda i, j, k: (i, k)),   # x   (M, K)  partial edges OK
                pl.BlockSpec((tk, tn), lambda i, j, k: (k, j)),   # W^T (Kp, Np) MXU-native
                pl.BlockSpec((1, tn), lambda i, j, k: (0, j)),    # bias (1, Np)
            ],
            out_specs=pl.BlockSpec((tm, tn), lambda i, j, k: (i, j)),
            scratch_shapes=[pltpu.VMEM((tm, tn), jnp.float32)],
        ),
        compiler_params=pltpu.CompilerParams(
            dimension_semantics=("parallel", "parallel", "arbitrary"),
        ),
        cost_estimate=cost,
    )(x2d, w_t, b_p)

    return y2d.reshape(*lead, N)


def init_linear_params(key, input_dim, output_dim):
    # Deterministic init mirroring nn.Linear default: U(-1/sqrt(in), 1/sqrt(in)).
    kw, kb = jax.random.split(key)
    bound = 1.0 / (input_dim ** 0.5)
    weight = jax.random.uniform(kw, (output_dim, input_dim), jnp.float32,
                                minval=-bound, maxval=bound)
    bias = jax.random.uniform(kb, (output_dim,), jnp.float32,
                              minval=-bound, maxval=bound)
    return weight, bias


if __name__ == "__main__":
    key = jax.random.PRNGKey(0)
    k_x, k_p = jax.random.split(key)

    input_dim, output_dim = 32, 16
    x = jax.random.normal(k_x, (2, 8, input_dim), jnp.float32)  # batch=2, seq=8
    weight, bias = init_linear_params(k_p, input_dim, output_dim)

    # Init-time prep (amortized across calls): transpose + pad weight/bias once.
    w_t, b_p, meta = prepare_linear_params(weight, bias)

    y = linear_pallas(x, w_t, b_p, meta)
    jax.block_until_ready(y)

    # Sanity-check against plain JAX reference (torch.nn.Linear semantics).
    y_ref = x @ weight.T + bias
    assert y.shape == (2, 8, output_dim)
    assert jnp.allclose(y, y_ref, atol=1e-5, rtol=1e-5)

    print("KERNEL_OK")
</pallas_src>

<mosaic_0001>
module attributes {stable_mosaic.version = 11 : i64} {
  func.func @kernel(%arg0: i32, %arg1: i32, %arg2: i32, %arg3: memref<16x128xf32, #tpu.memory_space<vmem>>, %arg4: memref<128x128xf32, #tpu.memory_space<vmem>>, %arg5: memref<1x128xf32, #tpu.memory_space<vmem>>, %arg6: memref<16x128xf32, #tpu.memory_space<vmem>>, %arg7: memref<16x128xf32, #tpu.memory_space<vmem>>) attributes {dimension_semantics = [#tpu.dimension_semantics<parallel>, #tpu.dimension_semantics<parallel>, #tpu.dimension_semantics<arbitrary>], iteration_bounds = array<i64: 1, 1, 1>, scalar_prefetch = 0 : i64, scratch_operands = 1 : i64, tpu.core_type = #tpu.core_type<tc>, window_params = [{transform_indices = @transform_0, window_bounds = array<i64: 16, 128>}, {transform_indices = @transform_1, window_bounds = array<i64: 128, 128>}, {transform_indices = @transform_2, window_bounds = array<i64: 1, 128>}, {transform_indices = @transform_3, window_bounds = array<i64: 16, 128>}]} {
    %c0 = arith.constant 0 : index
    %c0_0 = arith.constant 0 : index
    %0 = vector.load %arg3[%c0, %c0_0] : memref<16x128xf32, #tpu.memory_space<vmem>>, vector<16x128xf32>
    %1 = tpu.iota {dimensions = array<i32: 1>} : vector<16x128xi32>
    %c128_i32 = arith.constant 128 : i32
    %2 = arith.muli %arg2, %c128_i32 : i32
    %3 = vector.broadcast %2 : i32 to vector<16x128xi32>
    %4 = arith.addi %3, %1 : vector<16x128xi32>
    %c32_i32 = arith.constant 32 : i32
    %5 = vector.broadcast %c32_i32 : i32 to vector<16x128xi32>
    %6 = arith.cmpi slt, %4, %5 : vector<16x128xi32>
    %cst = arith.constant 0.000000e+00 : f32
    %7 = vector.broadcast %cst : f32 to vector<16x128xf32>
    %8 = arith.select %6, %0, %7 : vector<16x128xi1>, vector<16x128xf32>
    %c0_1 = arith.constant 0 : index
    %c0_2 = arith.constant 0 : index
    %9 = vector.load %arg4[%c0_1, %c0_2] : memref<128x128xf32, #tpu.memory_space<vmem>>, vector<128x128xf32>
    %cst_3 = arith.constant dense<0.000000e+00> : vector<16x128xf32>
    %10 = tpu.matmul %8, %9, %cst_3 {dimension_numbers = #tpu.dot_dimension_numbers<[1], [0], [0], [1], [0, 0, 1, 1], [], []>} : vector<16x128xf32>, vector<128x128xf32>, vector<16x128xf32> -> vector<16x128xf32>
    %c0_i32 = arith.constant 0 : i32
    %11 = arith.cmpi eq, %arg2, %c0_i32 : i32
    %12 = arith.extui %11 : i1 to i32
    %c0_i32_4 = arith.constant 0 : i32
    %13 = arith.cmpi ne, %12, %c0_i32_4 : i32
    scf.if %13 {
      %c0_9 = arith.constant 0 : index
      %c0_10 = arith.constant 0 : index
      %20 = vector.load %arg7[%c0_9, %c0_10] : memref<16x128xf32, #tpu.memory_space<vmem>>, vector<16x128xf32>
      tpu.vector_store %arg7[%c0_9, %c0_10], %10 {strides = array<i32>} : memref<16x128xf32, #tpu.memory_space<vmem>>, vector<16x128xf32>,
    } else {
    }
    %c0_i32_5 = arith.constant 0 : i32
    %14 = arith.cmpi sgt, %arg2, %c0_i32_5 : i32
    %15 = arith.extui %14 : i1 to i32
    %c0_i32_6 = arith.constant 0 : i32
    %16 = arith.cmpi ne, %15, %c0_i32_6 : i32
    scf.if %16 {
      %c0_9 = arith.constant 0 : index
      %c0_10 = arith.constant 0 : index
      %20 = vector.load %arg7[%c0_9, %c0_10] : memref<16x128xf32, #tpu.memory_space<vmem>>, vector<16x128xf32>
      %21 = arith.addf %20, %10 : vector<16x128xf32>
      %c0_11 = arith.constant 0 : index
      %c0_12 = arith.constant 0 : index
      %22 = vector.load %arg7[%c0_11, %c0_12] : memref<16x128xf32, #tpu.memory_space<vmem>>, vector<16x128xf32>
      tpu.vector_store %arg7[%c0_11, %c0_12], %21 {strides = array<i32>} : memref<16x128xf32, #tpu.memory_space<vmem>>, vector<16x128xf32>,
    } else {
    }
    %c0_i32_7 = arith.constant 0 : i32
    %17 = arith.cmpi eq, %arg2, %c0_i32_7 : i32
    %18 = arith.extui %17 : i1 to i32
    %c0_i32_8 = arith.constant 0 : i32
    %19 = arith.cmpi ne, %18, %c0_i32_8 : i32
    scf.if %19 {
      %c0_9 = arith.constant 0 : index
      %c0_10 = arith.constant 0 : index
      %20 = vector.load %arg7[%c0_9, %c0_10] : memref<16x128xf32, #tpu.memory_space<vmem>>, vector<16x128xf32>
      %c0_11 = arith.constant 0 : index
      %c0_12 = arith.constant 0 : index
      %21 = vector.load %arg5[%c0_11, %c0_12] : memref<1x128xf32, #tpu.memory_space<vmem>>, vector<1x128xf32>
      %22 = vector.broadcast %21 : vector<1x128xf32> to vector<16x128xf32>
      %23 = arith.addf %20, %22 : vector<16x128xf32>
      %c0_13 = arith.constant 0 : index
      %c0_14 = arith.constant 0 : index
      %24 = vector.load %arg6[%c0_13, %c0_14] : memref<16x128xf32, #tpu.memory_space<vmem>>, vector<16x128xf32>
      tpu.vector_store %arg6[%c0_13, %c0_14], %23 {strides = array<i32>} : memref<16x128xf32, #tpu.memory_space<vmem>>, vector<16x128xf32>,
    } else {
    }
    return
  }
  func.func @transform_0(%arg0: i32, %arg1: i32, %arg2: i32) -> (i32, i32) {
    %c0_i32 = arith.constant 0 : i32
    return %arg0, %arg2 : i32, i32
  }
  func.func @transform_1(%arg0: i32, %arg1: i32, %arg2: i32) -> (i32, i32) {
    %c0_i32 = arith.constant 0 : i32
    return %arg2, %arg1 : i32, i32
  }
  func.func @transform_2(%arg0: i32, %arg1: i32, %arg2: i32) -> (i32, i32) {
    %c0_i32 = arith.constant 0 : i32
    %c0_i32_0 = arith.constant 0 : i32
    return %c0_i32, %arg1 : i32, i32
  }
  func.func @transform_3(%arg0: i32, %arg1: i32, %arg2: i32) -> (i32, i32) {
    %c0_i32 = arith.constant 0 : i32
    return %arg0, %arg1 : i32, i32
  }
}

</mosaic_0001>

<llo_original>
// kernel: tpu_custom_call.1
$region0: #{tpu_custom_call.1}
  #allocation0 [shape = 'u32[]', space=smem, size = 0x4, offset = 0x4, fixed_abs, tag = 'smem constant byte address 0x4 - core index']
  #allocation1 [shape = 'u32[72,128]{1,0:T(1,128)}', space=vmem, size = 0x9000, scoped, tag = 'internal scratch']
  #allocation2 [shape = 'f32[16,128]{1,0:T(8,128)}', space=vmem, size = 0x2000, scoped, tag = 'scratch operand']
  %s0 = inlined_call_operand.hbm [shape: f32[16,32], index: 0, kind: input, shape index: {}]
  %s1 = inlined_call_operand.hbm [shape: f32[128,128], index: 1, kind: input, shape index: {}]
  %s2 = inlined_call_operand.vmem [shape: f32[1,128], index: 2, kind: input, shape index: {}]
  %s3 = inlined_call_operand.hbm [shape: f32[16,16], index: 3, kind: output, shape index: {}]
  %s4 = sld [smem:[#allocation0]]
  $region42: #{tpu_custom_call.1} parent=0
    _
  %s6 = ssub.s32 1, %s4
  %s7 = scalar_select 0, %s6, %s4
  $region1: #{tpu_custom_call.1} parent=0
    #allocation3 [shape = 'u8[8192]{0}', space=vmem, size = 0x2000, scoped, tag = 'input window, operand 0, single buffered']
    #allocation4 [shape = 's32[1]{0}', space=sflag, size = 0x4, scoped, tag = 'scoped memory for tpu_custom_call.1']
    #allocation5 [shape = 's32[1]{0}', space=sflag, size = 0x4, scoped, tag = 'scoped memory for tpu_custom_call.1']
    #allocation6 [shape = 'u8[65536]{0}', space=vmem, size = 0x10000, scoped, tag = 'input window, operand 1, single buffered']
    #allocation7 [shape = 's32[1]{0}', space=sflag, size = 0x4, scoped, tag = 'scoped memory for tpu_custom_call.1']
    #allocation8 [shape = 'u8[8192]{0}', space=vmem, size = 0x2000, scoped, tag = 'output window, operand 0, single buffered']
    %8 = vsyncpa [#allocation4], 0
    %9 = vsyncpa [#allocation7], 0
    %10 = vsyncpa [#allocation5], 0
    // Predicated region
    $region2: #{tpu_custom_call.1} parent=1 // pred_check
      _
    $region3: #{tpu_custom_call.1} parent=1 // pred_check_branch
      %12 = sbr.rel (0) target = $region5
    $region4: #{tpu_custom_call.1} parent=1 // pred_region
      %14 = vsyncadd [#allocation4], 0
      %s15 = sshll.u32 %s0, 4
      %s16 = int_to_ptr.hbm [resolvable:$true] %s15
      %s17 = sshll.u32 [#allocation3], 4
      %s18 = int_to_ptr.vmem [resolvable:$true] %s17
      %23 = dma.hbm_to_vmem [thread:$0]  %s16, 256, %s18, [#allocation4], 128, 128, 8
    $region5: #{tpu_custom_call.1} parent=1 // pred_fallthru
      _
    // Predicated region
    $region6: #{tpu_custom_call.1} parent=1 // pred_check
      _
    $region7: #{tpu_custom_call.1} parent=1 // pred_check_branch
      %25 = sbr.rel (0) target = $region9
    $region8: #{tpu_custom_call.1} parent=1 // pred_region
      %27 = vsyncadd [#allocation7], 0
      %s28 = sshll.u32 %s1, 4
      %s29 = int_to_ptr.hbm [resolvable:$true] %s28
      %s30 = sshll.u32 [#allocation6], 4
      %s31 = int_to_ptr.vmem [resolvable:$true] %s30
      %36 = dma.hbm_to_vmem [thread:$0]  %s29, 2048, %s31, [#allocation7], 128, 128, 8
    $region9: #{tpu_custom_call.1} parent=1 // pred_fallthru
      _
    // Predicated region
    $region10: #{tpu_custom_call.1} parent=1 // pred_check
      _
    $region11: #{tpu_custom_call.1} parent=1 // pred_check_branch
      %38 = sbr.rel (0) target = $region13
    $region12: #{tpu_custom_call.1} parent=1 // pred_region
      _
    $region13: #{tpu_custom_call.1} parent=1 // pred_fallthru
      _
    // Predicated region
    $region14: #{tpu_custom_call.1} parent=1 // pred_check
      _
    $region15: #{tpu_custom_call.1} parent=1 // pred_check_branch
      %40 = sbr.rel (0) target = $region17
    $region16: #{tpu_custom_call.1} parent=1 // pred_region
      %42 = dma.done [#allocation4], 256
    $region17: #{tpu_custom_call.1} parent=1 // pred_fallthru
      _
    // Predicated region
    $region18: #{tpu_custom_call.1} parent=1 // pred_check
      _
    $region19: #{tpu_custom_call.1} parent=1 // pred_check_branch
      %44 = sbr.rel (0) target = $region21
    $region20: #{tpu_custom_call.1} parent=1 // pred_region
      %46 = dma.done [#allocation7], 2048
    $region21: #{tpu_custom_call.1} parent=1 // pred_fallthru
      _
    %v47 = vld [vmem:[#allocation3] sm:$0xff]
    %v48 = vld [vmem:[#allocation3 + $0x8] sm:$0xff]
    %v49 = vlaneseq
    %v50 = vand.u32 %v49, 127
    %s51 = smul.u32 0, 128
    %v52 = vstv %s51
    %v53 = vadd.s32 %v52, %v50
    %vm54 = vcmp.lt.s32.totalorder %v53, 32
    %v55 = vsel %vm54, %v47, 0.0
    %v56 = vsel %vm54, %v48, 0.0
    %v57 = vld [vmem:[#allocation6] sm:$0xff]
    %v58 = vld [vmem:[#allocation6 + $0x8] sm:$0xff]
    %v59 = vld [vmem:[#allocation6 + $0x10] sm:$0xff]
    %v60 = vld [vmem:[#allocation6 + $0x18] sm:$0xff]
    %v61 = vld [vmem:[#allocation6 + $0x20] sm:$0xff]
    %v62 = vld [vmem:[#allocation6 + $0x28] sm:$0xff]
    %v63 = vld [vmem:[#allocation6 + $0x30] sm:$0xff]
    %v64 = vld [vmem:[#allocation6 + $0x38] sm:$0xff]
    %v65 = vld [vmem:[#allocation6 + $0x40] sm:$0xff]
    %v66 = vld [vmem:[#allocation6 + $0x48] sm:$0xff]
    %v67 = vld [vmem:[#allocation6 + $0x50] sm:$0xff]
    %v68 = vld [vmem:[#allocation6 + $0x58] sm:$0xff]
    %v69 = vld [vmem:[#allocation6 + $0x60] sm:$0xff]
    %v70 = vld [vmem:[#allocation6 + $0x68] sm:$0xff]
    %v71 = vld [vmem:[#allocation6 + $0x70] sm:$0xff]
    %v72 = vld [vmem:[#allocation6 + $0x78] sm:$0xff]
    %73 = vmatpush.msra.mxu0 %v72
    %74 = vmatpush.msra.mxu0 %v71
    %75 = vmatpush.msra.mxu0 %v70
    %76 = vmatpush.msra.mxu0 %v69
    %77 = vmatpush.msra.mxu0 %v68
    %78 = vmatpush.msra.mxu0 %v67
    %79 = vmatpush.msra.mxu0 %v66
    %80 = vmatpush.msra.mxu0 %v65
    %81 = vmatpush.msra.mxu0 %v64
    %82 = vmatpush.msra.mxu0 %v63
    %83 = vmatpush.msra.mxu0 %v62
    %84 = vmatpush.msra.mxu0 %v61
    %85 = vmatpush.msra.mxu0 %v60
    %86 = vmatpush.msra.mxu0 %v59
    %87 = vmatpush.msra.mxu0 %v58
    %88 = vmatpush.msra.mxu0 %v57
    %89 = vmatmul.f32.gmra.mxu0 %v55
    %v90 = vpop.f32.mrf.mxu0
    %v91 = vadd.f32 0.0, %v90
    %92 = vmatmul.f32.gmra.mxu0 %v56
    %v93 = vpop.f32.mrf.mxu0
    %v94 = vadd.f32 0.0, %v93
    %95 = vdwg.mxu0
    %p96 = scmp.eq.s32.totalorder 0, 0
    // Predicated region
    $region22: #{tpu_custom_call.1} parent=1 // pred_check
      %p97 = pneg %p96
    $region23: #{tpu_custom_call.1} parent=1 // pred_check_branch
      %99 = sbr.rel (%p97) target = $region25
    $region24: #{tpu_custom_call.1} parent=1 // pred_region
      %100 = vst [vmem:[#allocation2] sm:$0xff] %v91
      %101 = vst [vmem:[#allocation2 + $0x8] sm:$0xff] %v94
    $region25: #{tpu_custom_call.1} parent=1 // pred_fallthru
      _
    %p102 = scmp.gt.s32.totalorder 0, 0
    // Predicated region
    $region26: #{tpu_custom_call.1} parent=1 // pred_check
      %p103 = pneg %p102
    $region27: #{tpu_custom_call.1} parent=1 // pred_check_branch
      %105 = sbr.rel (%p103) target = $region29
    $region28: #{tpu_custom_call.1} parent=1 // pred_region
      %v106 = vld [vmem:[#allocation2] sm:$0xff]
      %v107 = vld [vmem:[#allocation2 + $0x8] sm:$0xff]
      %v108 = vadd.f32 %v106, %v91
      %v109 = vadd.f32 %v107, %v94
      %110 = vst [vmem:[#allocation2] sm:$0xff] %v108
      %111 = vst [vmem:[#allocation2 + $0x8] sm:$0xff] %v109
    $region29: #{tpu_custom_call.1} parent=1 // pred_fallthru
      _
    // Predicated region
    $region30: #{tpu_custom_call.1} parent=1 // pred_check
      %p112 = pneg %p96
    $region31: #{tpu_custom_call.1} parent=1 // pred_check_branch
      %114 = sbr.rel (%p112) target = $region33
    $region32: #{tpu_custom_call.1} parent=1 // pred_region
      %v115 = vld [vmem:[#allocation2] sm:$0xff]
      %v116 = vld [vmem:[#allocation2 + $0x8] sm:$0xff]
      %v117 = vld [vmem:[%s2] sm:$0x1]
      %v119 = vperm.slane %v117, 0
      %v121 = vadd.f32 %v115, %v119
      %v122 = vadd.f32 %v116, %v119
      %123 = vst [vmem:[#allocation8] sm:$0xff] %v121
      %124 = vst [vmem:[#allocation8 + $0x8] sm:$0xff] %v122
    $region33: #{tpu_custom_call.1} parent=1 // pred_fallthru
      _
    // Predicated region
    $region34: #{tpu_custom_call.1} parent=1 // pred_check
      _
    $region35: #{tpu_custom_call.1} parent=1 // pred_check_branch
      %126 = sbr.rel (0) target = $region37
    $region36: #{tpu_custom_call.1} parent=1 // pred_region
      %128 = vsyncadd [#allocation5], 0
      %s129 = sshll.u32 [#allocation8], 4
      %s130 = int_to_ptr.vmem [resolvable:$true] %s129
      %s131 = sshll.u32 %s3, 4
      %s132 = int_to_ptr.hbm [resolvable:$true] %s131
      %137 = dma.vmem_to_hbm [thread:$0]  %s130, 256, %s132, [#allocation5], 128, 128, 8
    $region37: #{tpu_custom_call.1} parent=1 // pred_fallthru
      _
    // Predicated region
    $region38: #{tpu_custom_call.1} parent=1 // pred_check
      _
    $region39: #{tpu_custom_call.1} parent=1 // pred_check_branch
      %139 = sbr.rel (0) target = $region41
    $region40: #{tpu_custom_call.1} parent=1 // pred_region
      %141 = dma.done [#allocation5], 256
    $region41: #{tpu_custom_call.1} parent=1 // pred_fallthru
      _
    %142 = vsyncpa [#allocation4], 1
    %143 = vsyncpa [#allocation7], 1
    %144 = vsyncpa [#allocation5], 1

</llo_original>
